<compile_context>
chip_gen: v6e
topology: v6e:2x2x1
jax: 0.10.0
libtpu: 0.0.40
codegen_flags: <defaults>
</compile_context>

<pallas_src>
import jax
import jax.numpy as jnp
from jax.experimental import pallas as pl
from jax.experimental.pallas import tpu as pltpu

_MAX_BLOCK_B = 8192  # rows per grid step once B is batched up (multiple of 128)


def mlp_kernel(x_ref, p_ref, o_ref):
    x = x_ref[...]            # [1, TB]   batch along lanes
    w1 = p_ref[:, 0:1]        # [H, 1]    Linear(1 -> H) weight column
    b1 = p_ref[:, 1:2]        # [H, 1]
    w2 = p_ref[:, 2:3]        # [H, 1]    Linear(H -> 1) weight column
    b2 = p_ref[0:1, 3:4]      # [1, 1]

    # Layer 1: K = 1 contraction -> pure VPU broadcast multiply-add, [H, TB].
    z = w1 * x + b1
    # sigmoid(z) = 0.5 * (1 + tanh(z/2)): single EUP transcendental, no
    # divide/reciprocal chain, matches 1/(1+exp(-z)) to ~1e-7 in f32.
    h = 0.5 * (1.0 + jnp.tanh(0.5 * z))
    # Layer 2: N = 1 contraction -> VPU multiply + XLU sublane reduce over H.
    out = jnp.sum(h * w2, axis=0, keepdims=True) + b2   # [1, TB], lane-dense
    o_ref[...] = out.astype(o_ref.dtype)


def pack_params(w1, b1, w2, b2):
    """One-time layout glue (outside the per-call hot path).

    w1: [H, 1], b1: [H], w2: [1, H], b2: [1]  ->  packed [H, 4] float32,
    columns = (w1, b1, w2^T, b2-broadcast).  Pure reshapes (F = O = 1).
    """
    H = b1.shape[0]
    return jnp.concatenate(
        [
            jnp.asarray(w1, jnp.float32).reshape(H, 1),
            jnp.asarray(b1, jnp.float32).reshape(H, 1),
            jnp.asarray(w2, jnp.float32).reshape(H, 1),
            jnp.broadcast_to(jnp.asarray(b2, jnp.float32).reshape(1, 1), (H, 1)),
        ],
        axis=1,
    )


def _pick_block_b(B):
    """Largest batch block: whole batch if small, else a 128-multiple divisor."""
    if B <= _MAX_BLOCK_B:
        return B
    tb = _MAX_BLOCK_B - (_MAX_BLOCK_B % 128)
    while tb >= 128:
        if B % tb == 0:
            return tb
        tb -= 128
    return B  # fall back to a single block


@jax.jit
def net_forward(x, params):
    """x: [B, 1] f32, params: [H, 4] f32 (from pack_params) -> [B, 1] f32."""
    B = x.shape[0]
    H = params.shape[0]

    xt = x.reshape(1, B)            # pure reshape (column vector -> row)
    tb = _pick_block_b(B)
    n_blocks = B // tb

    out_row = pl.pallas_call(
        mlp_kernel,
        out_shape=jax.ShapeDtypeStruct((1, B), jnp.float32),
        grid_spec=pltpu.PrefetchScalarGridSpec(
            num_scalar_prefetch=0,
            grid=(n_blocks,),
            in_specs=[
                pl.BlockSpec((1, tb), lambda i: (0, i)),   # batch tile
                pl.BlockSpec((H, 4), lambda i: (0, 0)),    # params, VMEM-resident
            ],
            out_specs=pl.BlockSpec((1, tb), lambda i: (0, i)),
        ),
        compiler_params=pltpu.CompilerParams(
            dimension_semantics=("parallel",),   # shard batch across TCs on v7x
        ),
        cost_estimate=pl.CostEstimate(
            flops=6 * B * H,
            transcendentals=B * H,
            bytes_accessed=4 * (2 * B + 4 * H),
        ),
    )(xt, params)

    return out_row.reshape(B, 1)


def net_forward_ref(x, w1, b1, w2, b2):
    """Pure-JAX reference matching PyTorch Net.forward."""
    h = jax.nn.sigmoid(x @ w1.T + b1)
    return h @ w2.T + b2


if __name__ == "__main__":
    # Shapes implied by the original script: Net(n_feature=1, n_hidden=32,
    # n_output=1), batch = steps = 16, x = linspace(0, 1, steps) column.
    B, F, H, O = 16, 1, 32, 1

    key = jax.random.PRNGKey(0)
    k1, k2, k3, k4 = jax.random.split(key, 4)

    x = jnp.linspace(0.0, 1.0, B, dtype=jnp.float32).reshape(B, F)

    # Deterministic PyTorch-Linear-style uniform init.
    bound1 = 1.0 / (F ** 0.5)
    bound2 = 1.0 / (H ** 0.5)
    w1 = jax.random.uniform(k1, (H, F), jnp.float32, -bound1, bound1)
    b1 = jax.random.uniform(k2, (H,), jnp.float32, -bound1, bound1)
    w2 = jax.random.uniform(k3, (O, H), jnp.float32, -bound2, bound2)
    b2 = jax.random.uniform(k4, (O,), jnp.float32, -bound2, bound2)

    params = pack_params(w1, b1, w2, b2)   # one-time, outside the hot path

    out = net_forward(x, params)
    out = jax.block_until_ready(out)

    ref = net_forward_ref(x, w1, b1, w2, b2)
    assert out.shape == (B, O)
    assert jnp.allclose(out, ref, atol=1e-5, rtol=1e-5), float(jnp.abs(out - ref).max())

    print("KERNEL_OK")
</pallas_src>

<mosaic_0001>
module attributes {stable_mosaic.version = 11 : i64} {
  func.func @mlp_kernel(%arg0: i32, %arg1: memref<1x16xf32, #tpu.memory_space<vmem>>, %arg2: memref<32x4xf32, #tpu.memory_space<vmem>>, %arg3: memref<1x16xf32, #tpu.memory_space<vmem>>) attributes {dimension_semantics = [#tpu.dimension_semantics<parallel>], iteration_bounds = array<i64: 1>, scalar_prefetch = 0 : i64, scratch_operands = 0 : i64, tpu.core_type = #tpu.core_type<tc>, window_params = [{transform_indices = @transform_0, window_bounds = array<i64: 1, 16>}, {pipeline_mode = #tpu.pipeline_mode<synchronous>, transform_indices = @transform_1, window_bounds = array<i64: 32, 4>}, {transform_indices = @transform_2, window_bounds = array<i64: 1, 16>}]} {
    %c0 = arith.constant 0 : index
    %c0_0 = arith.constant 0 : index
    %0 = vector.load %arg1[%c0, %c0_0] : memref<1x16xf32, #tpu.memory_space<vmem>>, vector<1x16xf32>
    %c0_1 = arith.constant 0 : index
    %c0_2 = arith.constant 0 : index
    %1 = vector.load %arg2[%c0_1, %c0_2] : memref<32x4xf32, #tpu.memory_space<vmem>>, vector<32x1xf32>
    %c0_3 = arith.constant 0 : index
    %c1 = arith.constant 1 : index
    %2 = vector.load %arg2[%c0_3, %c1] : memref<32x4xf32, #tpu.memory_space<vmem>>, vector<32x1xf32>
    %c0_4 = arith.constant 0 : index
    %c2 = arith.constant 2 : index
    %3 = vector.load %arg2[%c0_4, %c2] : memref<32x4xf32, #tpu.memory_space<vmem>>, vector<32x1xf32>
    %c0_5 = arith.constant 0 : index
    %c3 = arith.constant 3 : index
    %4 = vector.load %arg2[%c0_5, %c3] : memref<32x4xf32, #tpu.memory_space<vmem>>, vector<1x1xf32>
    %5 = vector.broadcast %1 : vector<32x1xf32> to vector<32x16xf32>
    %6 = vector.broadcast %0 : vector<1x16xf32> to vector<32x16xf32>
    %7 = arith.mulf %5, %6 : vector<32x16xf32>
    %8 = vector.broadcast %2 : vector<32x1xf32> to vector<32x16xf32>
    %9 = arith.addf %7, %8 : vector<32x16xf32>
    %cst = arith.constant 5.000000e-01 : f32
    %10 = vector.broadcast %cst : f32 to vector<32x16xf32>
    %11 = arith.mulf %10, %9 : vector<32x16xf32>
    %12 = math.tanh %11 : vector<32x16xf32>
    %cst_6 = arith.constant 1.000000e+00 : f32
    %13 = vector.broadcast %cst_6 : f32 to vector<32x16xf32>
    %14 = arith.addf %13, %12 : vector<32x16xf32>
    %cst_7 = arith.constant 5.000000e-01 : f32
    %15 = vector.broadcast %cst_7 : f32 to vector<32x16xf32>
    %16 = arith.mulf %15, %14 : vector<32x16xf32>
    %17 = vector.broadcast %3 : vector<32x1xf32> to vector<32x16xf32>
    %18 = arith.mulf %16, %17 : vector<32x16xf32>
    %cst_8 = arith.constant dense<0.000000e+00> : vector<16xf32>
    %19 = vector.multi_reduction <add>, %18, %cst_8 [0] : vector<32x16xf32> to vector<16xf32>
    %20 = vector.shape_cast %19 : vector<16xf32> to vector<1x16xf32>
    %21 = vector.broadcast %4 : vector<1x1xf32> to vector<1x16xf32>
    %22 = arith.addf %20, %21 : vector<1x16xf32>
    %c0_9 = arith.constant 0 : index
    %c0_10 = arith.constant 0 : index
    %23 = vector.load %arg3[%c0_9, %c0_10] : memref<1x16xf32, #tpu.memory_space<vmem>>, vector<1x16xf32>
    tpu.vector_store %arg3[%c0_9, %c0_10], %22 {strides = array<i32>} : memref<1x16xf32, #tpu.memory_space<vmem>>, vector<1x16xf32>,
    return
  }
  func.func @transform_0(%arg0: i32) -> (i32, i32) {
    %c0_i32 = arith.constant 0 : i32
    %c0_i32_0 = arith.constant 0 : i32
    return %c0_i32, %arg0 : i32, i32
  }
  func.func @transform_1(%arg0: i32) -> (i32, i32) {
    %c0_i32 = arith.constant 0 : i32
    %c0_i32_0 = arith.constant 0 : i32
    %c0_i32_1 = arith.constant 0 : i32
    return %c0_i32, %c0_i32_0 : i32, i32
  }
  func.func @transform_2(%arg0: i32) -> (i32, i32) {
    %c0_i32 = arith.constant 0 : i32
    %c0_i32_0 = arith.constant 0 : i32
    return %c0_i32, %arg0 : i32, i32
  }
}

</mosaic_0001>

<llo_original>
// kernel: net_forward.1
$region0: #{net_forward.1}
  #allocation0 [shape = 'u32[]', space=smem, size = 0x4, offset = 0x4, fixed_abs, tag = 'smem constant byte address 0x4 - core index']
  #allocation1 [shape = 'u32[144,128]{1,0:T(1,128)}', space=vmem, size = 0x12000, scoped, tag = 'internal scratch']
  %s0 = inlined_call_operand.vmem [shape: f32[1,16], index: 0, kind: input, shape index: {}]
  %s1 = inlined_call_operand.vmem [shape: f32[32,4], index: 1, kind: input, shape index: {}]
  %s2 = inlined_call_operand.hbm [shape: f32[1,16], index: 2, kind: output, shape index: {}]
  %s3 = sld [smem:[#allocation0]]
  $region18: #{net_forward.1} parent=0
    _
  %s5 = ssub.s32 1, %s3
  %s6 = scalar_select 0, %s5, %s3
  $region1: #{net_forward.1} parent=0
    #allocation2 [shape = 'u8[512]{0}', space=vmem, size = 0x400, scoped, tag = 'output window, operand 0, single buffered']
    #allocation3 [shape = 's32[1]{0}', space=sflag, size = 0x4, scoped, tag = 'scoped memory for net_forward.1']
    %7 = vsyncpa [#allocation3], 0
    // Predicated region
    $region2: #{net_forward.1} parent=1 // pred_check
      _
    $region3: #{net_forward.1} parent=1 // pred_check_branch
      %9 = sbr.rel (0) target = $region5
    $region4: #{net_forward.1} parent=1 // pred_region
      _
    $region5: #{net_forward.1} parent=1 // pred_fallthru
      _
    // Predicated region
    $region6: #{net_forward.1} parent=1 // pred_check
      _
    $region7: #{net_forward.1} parent=1 // pred_check_branch
      %11 = sbr.rel (0) target = $region9
    $region8: #{net_forward.1} parent=1 // pred_region
      _
    $region9: #{net_forward.1} parent=1 // pred_fallthru
      _
    %v12 = vld [vmem:[%s0] sm:$0x1]
    %v13 = vld [vmem:[%s1] sm:$0xff]
    %v14 = vld [vmem:[%s1 + $0x8] sm:$0xff]
    %v15 = vld [vmem:[%s1 + $0x10] sm:$0xff]
    %v16 = vld [vmem:[%s1 + $0x18] sm:$0xff]
    %v17 = vld [vmem:[%s1] sm:$0x1]
    %19 = vset.pattern.permute.xlu0 0
    %20 = vperm.xlu0 %19, %v13
    %v21 = vpop.permute.xlu0 %20
    %24 = vset.pattern.permute.xlu0 0
    %25 = vperm.xlu0 %24, %v14
    %v26 = vpop.permute.xlu0 %25
    %29 = vset.pattern.permute.xlu0 0
    %30 = vperm.xlu0 %29, %v15
    %v31 = vpop.permute.xlu0 %30
    %34 = vset.pattern.permute.xlu0 0
    %35 = vperm.xlu0 %34, %v16
    %v36 = vpop.permute.xlu0 %35
    %v39 = vlaneseq
    %v40 = vshrl.u32 %v39, 7
    %v41 = vsub.s32 0, %v40
    %v42 = vrot.slane %v12, %v41
    %v44 = vmul.f32 %v21, %v42
    %v45 = vmul.f32 %v26, %v42
    %v46 = vmul.f32 %v31, %v42
    %v47 = vmul.f32 %v36, %v42
    %48 = vset.pattern.permute.xlu0 1
    %49 = vperm.xlu0 %48, %v13
    %v50 = vpop.permute.xlu0 %49
    %52 = vset.pattern.permute.xlu0 1
    %53 = vperm.xlu0 %52, %v14
    %v54 = vpop.permute.xlu0 %53
    %56 = vset.pattern.permute.xlu0 1
    %57 = vperm.xlu0 %56, %v15
    %v58 = vpop.permute.xlu0 %57
    %60 = vset.pattern.permute.xlu0 1
    %61 = vperm.xlu0 %60, %v16
    %v62 = vpop.permute.xlu0 %61
    %v64 = vadd.f32 %v44, %v50
    %v65 = vadd.f32 %v45, %v54
    %v66 = vadd.f32 %v46, %v58
    %v67 = vadd.f32 %v47, %v62
    %v68 = vmul.f32 %v64, 0.5
    %v69 = vmul.f32 %v65, 0.5
    %v70 = vmul.f32 %v66, 0.5
    %v71 = vmul.f32 %v67, 0.5
    %v72 = vtanh.pop %v68
    %v73 = vtanh.pop %v69
    %v74 = vtanh.pop %v70
    %v75 = vtanh.pop %v71
    %v76 = vadd.f32 %v72, 1.0
    %v77 = vadd.f32 %v73, 1.0
    %v78 = vadd.f32 %v74, 1.0
    %v79 = vadd.f32 %v75, 1.0
    %v80 = vmul.f32 %v76, 0.5
    %v81 = vmul.f32 %v77, 0.5
    %v82 = vmul.f32 %v78, 0.5
    %v83 = vmul.f32 %v79, 0.5
    %84 = vset.pattern.permute.xlu0 2
    %85 = vperm.xlu0 %84, %v13
    %v86 = vpop.permute.xlu0 %85
    %88 = vset.pattern.permute.xlu0 2
    %89 = vperm.xlu0 %88, %v14
    %v90 = vpop.permute.xlu0 %89
    %92 = vset.pattern.permute.xlu0 2
    %93 = vperm.xlu0 %92, %v15
    %v94 = vpop.permute.xlu0 %93
    %96 = vset.pattern.permute.xlu0 2
    %97 = vperm.xlu0 %96, %v16
    %v98 = vpop.permute.xlu0 %97
    %v100 = vmul.f32 %v80, %v86
    %v101 = vmul.f32 %v81, %v90
    %v102 = vmul.f32 %v82, %v94
    %v103 = vmul.f32 %v83, %v98
    %vm104 = vcmask 130048
    %v105 = vsel %vm104, %v100, 0.0
    %v106 = vsel %vm104, %v101, 0.0
    %v107 = vadd.f32 %v105, %v106
    %v108 = vsel %vm104, %v102, 0.0
    %v109 = vadd.f32 %v107, %v108
    %v110 = vsel %vm104, %v103, 0.0
    %v111 = vadd.f32 %v109, %v110
    %v112 = vrot.slane %v111, 4
    %v113 = vadd.f32 %v111, %v112
    %v114 = vrot.slane %v113, 2
    %v115 = vadd.f32 %v113, %v114
    %v116 = vrot.slane %v115, 1
    %v117 = vadd.f32 %v115, %v116
    %119 = vset.pattern.permute.xlu0 3
    %120 = vperm.xlu0 %119, %v17
    %v121 = vpop.permute.xlu0 %120
    %v123 = vadd.f32 %v117, %v121
    %vm124 = vcmask 122880
    %125 = vst.msk [vmem:[#allocation2] sm:$0x1] %vm124, %v123
    // Predicated region
    $region10: #{net_forward.1} parent=1 // pred_check
      _
    $region11: #{net_forward.1} parent=1 // pred_check_branch
      %127 = sbr.rel (0) target = $region13
    $region12: #{net_forward.1} parent=1 // pred_region
      %s129 = ssub.s32 16, 16
      %130 = vsyncadd [#allocation3], %s129
      %s132 = sshll.u32 [#allocation2], 4
      %s133 = int_to_ptr.vmem [resolvable:$true] %s132
      %135 = dma.vmem_to_hbm [thread:$0]  %s133, 16, %s2, [#allocation3]
    $region13: #{net_forward.1} parent=1 // pred_fallthru
      _
    // Predicated region
    $region14: #{net_forward.1} parent=1 // pred_check
      _
    $region15: #{net_forward.1} parent=1 // pred_check_branch
      %137 = sbr.rel (0) target = $region17
    $region16: #{net_forward.1} parent=1 // pred_region
      %138 = dma.done [#allocation3], 16
    $region17: #{net_forward.1} parent=1 // pred_fallthru
      _
    %139 = vsyncpa [#allocation3], 1

</llo_original>
